<compile_context>
chip_gen: v6e
topology: v6e:2x2x1
jax: 0.10.0
libtpu: 0.0.40
codegen_flags: <defaults>
</compile_context>

<pallas_src>
import functools

import numpy as np
import jax
import jax.numpy as jnp
from jax import lax
from jax.experimental import pallas as pl
from jax.experimental.pallas import tpu as pltpu


def build_hadamard_unitary(qubits: int) -> np.ndarray:
    """Real part of H^{⊗qubits}; the imaginary part is identically zero."""
    h = np.array([[1.0, 1.0], [1.0, -1.0]], dtype=np.float32) / np.float32(np.sqrt(2.0))
    u = h
    for _ in range(1, qubits):
        u = np.kron(u, h).astype(np.float32)
    return u  # (2^q, 2^q) float32


def _hadamard_kernel(x_ref, w_ref, y_ref):
    # One real MXU matmul per (TB, W) tile of interleaved [re, im] activations.
    y_ref[...] = jnp.dot(x_ref[...], w_ref[...], preferred_element_type=jnp.float32)


def _round_up(x: int, m: int) -> int:
    return ((x + m - 1) // m) * m


def _pick_tile_rows(rows: int, width: int, w_bytes: int) -> tuple[int, int]:
    """Row tile (multiple of 8) for (tb, width) f32 blocks and a VMEM limit."""
    # Generation-aware budget: 128 MiB VMEM on v5e/v6e, 64 MiB per core on v7x.
    try:
        phys = int(pltpu.get_tpu_info().vmem_capacity_bytes)
    except Exception:
        phys = 64 << 20  # conservative fallback (v7x per-core VMEM)
    vmem_limit = (phys * 3) // 4  # leave headroom for compiler scratch/spills

    # Bytes left for the double-buffered (input + output) row tiles after
    # conservatively charging a double-buffered resident unitary.
    io_budget = max(vmem_limit - w_bytes - (4 << 20), 1 << 20)
    per_row = 2 * 2 * width * 4  # in + out tiles, double-buffered, f32
    tb = io_budget // per_row
    # ~8 MiB input blocks amortize the ~0.35 us fixed per-grid-step overhead.
    tb = min(tb, (8 << 20) // (width * 4))
    # Keep >= ~4 tiles for medium/large batches so the "parallel" grid axis
    # actually gives both v7x TensorCores work (and overlaps DMA with compute).
    tb = min(tb, max(512, _round_up(pl.cdiv(rows, 4), 8)))
    tb = max(8, (tb // 8) * 8)
    return int(tb), int(vmem_limit)


@functools.partial(jax.jit, static_argnames=("qubits",))
def hadamard_forward(x: jax.Array, qubits: int) -> jax.Array:
    """Apply H^{⊗qubits} to the last dim of x (complex), matching x.matmul(U)."""
    dim = 2 ** qubits
    if x.shape[-1] != dim:
        raise ValueError(f"last dim of x must be 2**qubits = {dim}, got {x.shape[-1]}")

    lead = x.shape[:-1]
    rows = int(np.prod(lead)) if lead else 1

    # complex64 -> interleaved f32 [re0, im0, re1, im1, ...] in ONE fused pass.
    # TODO(synk): this copy disappears entirely once XLA supports complex<->real
    # bitcasts (or if activations are kept in the interleaved f32 layout across
    # consecutive gate applications).
    xc = x.astype(jnp.complex64)
    width = 2 * dim
    x_f32 = jnp.stack([jnp.real(xc), jnp.imag(xc)], axis=-1).reshape(rows, width)

    # Lane-dense packing: fold g consecutive rows into one 128-lane row when the
    # interleaved width is below a full vreg lane span (q <= 5).
    g = max(1, 128 // width)
    if g > 1 and rows % g != 0:
        g = 1
    rows_eff = rows // g
    width_eff = width * g
    x_in = x_f32.reshape(rows_eff, width_eff)

    # W = blockdiag_g(U ⊗ I2): real matrix computing the complex matmul on the
    # interleaved layout. Trace-time constant.
    # TODO(synk): for q >= ~10 switch to the Kronecker/FWHT factorization so the
    # dense (2^q, 2^q) unitary never has to be resident/double-buffered in VMEM.
    u = build_hadamard_unitary(qubits)
    w_np = np.kron(u, np.eye(2, dtype=np.float32)).astype(np.float32)
    if g > 1:
        w_np = np.kron(np.eye(g, dtype=np.float32), w_np).astype(np.float32)
    w = jnp.asarray(w_np)  # (width_eff, width_eff) f32

    w_bytes = 2 * width_eff * width_eff * 4  # unitary, counted double-buffered
    tb, vmem_limit = _pick_tile_rows(rows_eff, width_eff, w_bytes)
    tb = min(tb, _round_up(rows_eff, 8))  # never larger than one (padded) block
    n_tiles = pl.cdiv(rows_eff, tb)       # ragged last block: OOB writes dropped

    y = pl.pallas_call(
        _hadamard_kernel,
        out_shape=jax.ShapeDtypeStruct((rows_eff, width_eff), jnp.float32),
        grid_spec=pltpu.PrefetchScalarGridSpec(
            num_scalar_prefetch=0,
            grid=(n_tiles,),
            in_specs=[
                pl.BlockSpec((tb, width_eff), lambda i: (i, 0)),
                pl.BlockSpec((width_eff, width_eff), lambda i: (0, 0)),
            ],
            out_specs=pl.BlockSpec((tb, width_eff), lambda i: (i, 0)),
        ),
        compiler_params=pltpu.CompilerParams(
            dimension_semantics=("parallel",),
            vmem_limit_bytes=int(vmem_limit),
        ),
    )(x_in, w)

    # Interleaved f32 -> complex64 in one fused pass.
    y = y.reshape(rows, dim, 2)
    out = lax.complex(y[..., 0], y[..., 1])
    return out.reshape(lead + (dim,))


if __name__ == "__main__":
    qubits = 5                      # state dim = 32
    dim = 2 ** qubits

    key = jax.random.PRNGKey(0)
    kr, ki = jax.random.split(key)

    u_c = jnp.asarray(build_hadamard_unitary(qubits)).astype(jnp.complex64)

    # Main check: (4, 8) leading batch (flattened to 32 rows internally).
    batch = (4, 8)
    x_re = jax.random.normal(kr, batch + (dim,), dtype=jnp.float32)
    x_im = jax.random.normal(ki, batch + (dim,), dtype=jnp.float32)
    x = lax.complex(x_re, x_im).astype(jnp.complex64)

    y = jax.block_until_ready(hadamard_forward(x, qubits))
    y_ref = x @ u_c
    assert y.shape == x.shape and y.dtype == jnp.complex64
    assert jnp.allclose(y, y_ref, atol=1e-4, rtol=1e-4)

    # Ragged / non-grouped path: odd row count exercises the partial last block.
    x2 = x.reshape(-1, dim)[:5]
    y2 = jax.block_until_ready(hadamard_forward(x2, qubits))
    assert jnp.allclose(y2, x2 @ u_c, atol=1e-4, rtol=1e-4)

    print("KERNEL_OK")
</pallas_src>

<mosaic_0001>
module attributes {stable_mosaic.version = 11 : i64} {
  func.func @_hadamard_kernel(%arg0: i32, %arg1: memref<16x128xf32, #tpu.memory_space<vmem>>, %arg2: memref<128x128xf32, #tpu.memory_space<vmem>>, %arg3: memref<16x128xf32, #tpu.memory_space<vmem>>) attributes {dimension_semantics = [#tpu.dimension_semantics<parallel>], iteration_bounds = array<i64: 1>, scalar_prefetch = 0 : i64, scratch_operands = 0 : i64, tpu.core_type = #tpu.core_type<tc>, window_params = [{transform_indices = @transform_0, window_bounds = array<i64: 16, 128>}, {pipeline_mode = #tpu.pipeline_mode<synchronous>, transform_indices = @transform_1, window_bounds = array<i64: 128, 128>}, {transform_indices = @transform_2, window_bounds = array<i64: 16, 128>}]} {
    %c0 = arith.constant 0 : index
    %c0_0 = arith.constant 0 : index
    %0 = vector.load %arg1[%c0, %c0_0] : memref<16x128xf32, #tpu.memory_space<vmem>>, vector<16x128xf32>
    %c0_1 = arith.constant 0 : index
    %c0_2 = arith.constant 0 : index
    %1 = vector.load %arg2[%c0_1, %c0_2] : memref<128x128xf32, #tpu.memory_space<vmem>>, vector<128x128xf32>
    %cst = arith.constant dense<0.000000e+00> : vector<16x128xf32>
    %2 = tpu.matmul %0, %1, %cst {dimension_numbers = #tpu.dot_dimension_numbers<[1], [0], [0], [1], [0, 0, 1, 1], [], []>} : vector<16x128xf32>, vector<128x128xf32>, vector<16x128xf32> -> vector<16x128xf32>
    %c0_3 = arith.constant 0 : index
    %c0_4 = arith.constant 0 : index
    %3 = vector.load %arg3[%c0_3, %c0_4] : memref<16x128xf32, #tpu.memory_space<vmem>>, vector<16x128xf32>
    tpu.vector_store %arg3[%c0_3, %c0_4], %2 {strides = array<i32>} : memref<16x128xf32, #tpu.memory_space<vmem>>, vector<16x128xf32>,
    return
  }
  func.func @transform_0(%arg0: i32) -> (i32, i32) {
    %c0_i32 = arith.constant 0 : i32
    %c0_i32_0 = arith.constant 0 : i32
    return %arg0, %c0_i32 : i32, i32
  }
  func.func @transform_1(%arg0: i32) -> (i32, i32) {
    %c0_i32 = arith.constant 0 : i32
    %c0_i32_0 = arith.constant 0 : i32
    %c0_i32_1 = arith.constant 0 : i32
    return %c0_i32, %c0_i32_0 : i32, i32
  }
  func.func @transform_2(%arg0: i32) -> (i32, i32) {
    %c0_i32 = arith.constant 0 : i32
    %c0_i32_0 = arith.constant 0 : i32
    return %arg0, %c0_i32 : i32, i32
  }
}

</mosaic_0001>

<llo_original>
// kernel: custom-call
$region0: #{custom-call}
  %s0 = inlined_call_operand.hbm [shape: c64[4,8,32], index: 0, kind: input, shape index: {}]
  %s1 = inlined_call_operand.vmem [shape: f32[4,8,32], index: 1, kind: output, shape index: {}]
  $region1: #{custom-call} parent=0
    #allocation0 [shape = 's32[1]{0}', space=sflag, size = 0x4, scoped, tag = 'scoped memory for custom-call']
    %2 = vsyncpa [#allocation0], 0
    %s3 = sshll.u32 %s1, 4
    %s4 = int_to_ptr.vmem [resolvable:$true] %s3
    %6 = dma.hbm_to_vmem [thread:$0]  %s0, 512, %s4, [#allocation0]
    %7 = dma.done [#allocation0], 512
    %8 = vsyncpa [#allocation0], 1

// kernel: custom-call.1
$region0: #{custom-call.1}
  %s0 = inlined_call_operand.hbm [shape: c64[4,8,32], index: 0, kind: input, shape index: {}]
  %s1 = inlined_call_operand.vmem [shape: f32[4,8,32], index: 1, kind: output, shape index: {}]
  %s2 = scalar_lea.hbm %s0, 512
  $region1: #{custom-call.1} parent=0
    #allocation0 [shape = 's32[1]{0}', space=sflag, size = 0x4, scoped, tag = 'scoped memory for custom-call.1']
    %3 = vsyncpa [#allocation0], 0
    %s4 = sshll.u32 %s1, 4
    %s5 = int_to_ptr.vmem [resolvable:$true] %s4
    %7 = dma.hbm_to_vmem [thread:$0]  %s2, 512, %s5, [#allocation0]
    %8 = dma.done [#allocation0], 512
    %9 = vsyncpa [#allocation0], 1

// kernel: hadamard_forward.1
$region0: #{hadamard_forward.1}
  #allocation0 [shape = 'u32[]', space=smem, size = 0x4, offset = 0x4, fixed_abs, tag = 'smem constant byte address 0x4 - core index']
  #allocation1 [shape = 'u32[144,128]{1,0:T(1,128)}', space=vmem, size = 0x12000, scoped, tag = 'internal scratch']
  %s0 = inlined_call_operand.vmem [shape: f32[16,128], index: 0, kind: input, shape index: {}]
  %s1 = inlined_call_operand.vmem [shape: f32[128,128], index: 1, kind: input, shape index: {}]
  %s2 = inlined_call_operand.vmem [shape: f32[16,128], index: 2, kind: output, shape index: {}]
  %s3 = sld [smem:[#allocation0]]
  $region18: #{hadamard_forward.1} parent=0
    _
  %s5 = ssub.s32 1, %s3
  %s6 = scalar_select 0, %s5, %s3
  // Predicated region
  $region2: #{hadamard_forward.1} parent=0 // pred_check
    _
  $region3: #{hadamard_forward.1} parent=0 // pred_check_branch
    %8 = sbr.rel (0) target = $region5
  $region4: #{hadamard_forward.1} parent=0 // pred_region
    _
  $region5: #{hadamard_forward.1} parent=0 // pred_fallthru
    _
  // Predicated region
  $region6: #{hadamard_forward.1} parent=0 // pred_check
    _
  $region7: #{hadamard_forward.1} parent=0 // pred_check_branch
    %10 = sbr.rel (0) target = $region9
  $region8: #{hadamard_forward.1} parent=0 // pred_region
    _
  $region9: #{hadamard_forward.1} parent=0 // pred_fallthru
    _
  %v11 = vld [vmem:[%s0] sm:$0xff]
  %v12 = vld [vmem:[%s0 + $0x8] sm:$0xff]
  %v13 = vld [vmem:[%s1] sm:$0xff]
  %v14 = vld [vmem:[%s1 + $0x8] sm:$0xff]
  %v15 = vld [vmem:[%s1 + $0x10] sm:$0xff]
  %v16 = vld [vmem:[%s1 + $0x18] sm:$0xff]
  %v17 = vld [vmem:[%s1 + $0x20] sm:$0xff]
  %v18 = vld [vmem:[%s1 + $0x28] sm:$0xff]
  %v19 = vld [vmem:[%s1 + $0x30] sm:$0xff]
  %v20 = vld [vmem:[%s1 + $0x38] sm:$0xff]
  %v21 = vld [vmem:[%s1 + $0x40] sm:$0xff]
  %v22 = vld [vmem:[%s1 + $0x48] sm:$0xff]
  %v23 = vld [vmem:[%s1 + $0x50] sm:$0xff]
  %v24 = vld [vmem:[%s1 + $0x58] sm:$0xff]
  %v25 = vld [vmem:[%s1 + $0x60] sm:$0xff]
  %v26 = vld [vmem:[%s1 + $0x68] sm:$0xff]
  %v27 = vld [vmem:[%s1 + $0x70] sm:$0xff]
  %v28 = vld [vmem:[%s1 + $0x78] sm:$0xff]
  %29 = vmatprep.subr.mxu0 0.0
  %30 = vmatpush1.msra.mxu0 %v28
  %31 = vmatprep.subr.mxu0 0.0
  %32 = vmatpush1.msra.mxu0 %v27
  %33 = vmatprep.subr.mxu0 0.0
  %34 = vmatpush1.msra.mxu0 %v26
  %35 = vmatprep.subr.mxu0 0.0
  %36 = vmatpush1.msra.mxu0 %v25
  %37 = vmatprep.subr.mxu0 0.0
  %38 = vmatpush1.msra.mxu0 %v24
  %39 = vmatprep.subr.mxu0 0.0
  %40 = vmatpush1.msra.mxu0 %v23
  %41 = vmatprep.subr.mxu0 0.0
  %42 = vmatpush1.msra.mxu0 %v22
  %43 = vmatprep.subr.mxu0 0.0
  %44 = vmatpush1.msra.mxu0 %v21
  %45 = vmatprep.subr.mxu0 0.0
  %46 = vmatpush1.msra.mxu0 %v20
  %47 = vmatprep.subr.mxu0 0.0
  %48 = vmatpush1.msra.mxu0 %v19
  %49 = vmatprep.subr.mxu0 0.0
  %50 = vmatpush1.msra.mxu0 %v18
  %51 = vmatprep.subr.mxu0 0.0
  %52 = vmatpush1.msra.mxu0 %v17
  %53 = vmatprep.subr.mxu0 0.0
  %54 = vmatpush1.msra.mxu0 %v16
  %55 = vmatprep.subr.mxu0 0.0
  %56 = vmatpush1.msra.mxu0 %v15
  %57 = vmatprep.subr.mxu0 0.0
  %58 = vmatpush1.msra.mxu0 %v14
  %59 = vmatprep.subr.mxu0 0.0
  %60 = vmatpush1.msra.mxu0 %v13
  %61 = vmatprep.subr.mxu0 0.0
  %62 = vmatpush2.msra.mxu0 0.0
  %63 = vmatprep.subr.mxu0 0.0
  %64 = vmatpush2.msra.mxu0 0.0
  %65 = vmatprep.subr.mxu0 0.0
  %66 = vmatpush2.msra.mxu0 0.0
  %67 = vmatprep.subr.mxu0 0.0
  %68 = vmatpush2.msra.mxu0 0.0
  %69 = vmatprep.subr.mxu0 0.0
  %70 = vmatpush2.msra.mxu0 0.0
  %71 = vmatprep.subr.mxu0 0.0
  %72 = vmatpush2.msra.mxu0 0.0
  %73 = vmatprep.subr.mxu0 0.0
  %74 = vmatpush2.msra.mxu0 0.0
  %75 = vmatprep.subr.mxu0 0.0
  %76 = vmatpush2.msra.mxu0 0.0
  %77 = vmatprep.subr.mxu0 0.0
  %78 = vmatpush2.msra.mxu0 0.0
  %79 = vmatprep.subr.mxu0 0.0
  %80 = vmatpush2.msra.mxu0 0.0
  %81 = vmatprep.subr.mxu0 0.0
  %82 = vmatpush2.msra.mxu0 0.0
  %83 = vmatprep.subr.mxu0 0.0
  %84 = vmatpush2.msra.mxu0 0.0
  %85 = vmatprep.subr.mxu0 0.0
  %86 = vmatpush2.msra.mxu0 0.0
  %87 = vmatprep.subr.mxu0 0.0
  %88 = vmatpush2.msra.mxu0 0.0
  %89 = vmatprep.subr.mxu0 0.0
  %90 = vmatpush2.msra.mxu0 0.0
  %91 = vmatprep.subr.mxu0 0.0
  %92 = vmatpush2.msra.mxu0 0.0
  %93 = vmatprep.mubr.f32.mxu0 0.0
  %94 = vmatmul.mubr.f32.gmra.mxu0 %v11
  %v95 = vpop.f32.mrf.mxu0
  %v96 = vadd.f32 0.0, %v95
  %v97 = vpop.f32.mrf.mxu0
  %98 = vmatprep.mubr.f32.mxu0 0.0
  %99 = vmatmul.mubr.f32.gmra.mxu0 %v12
  %v100 = vpop.f32.mrf.mxu0
  %v101 = vadd.f32 0.0, %v100
  %v102 = vpop.f32.mrf.mxu0
  %103 = vdwg.mxu0
  %104 = vst [vmem:[%s2] sm:$0xff] %v96
  %105 = vst [vmem:[%s2 + $0x8] sm:$0xff] %v101
  // Predicated region
  $region10: #{hadamard_forward.1} parent=0 // pred_check
    _
  $region11: #{hadamard_forward.1} parent=0 // pred_check_branch
    %107 = sbr.rel (0) target = $region13
  $region12: #{hadamard_forward.1} parent=0 // pred_region
    _
  $region13: #{hadamard_forward.1} parent=0 // pred_fallthru
    _
  // Predicated region
  $region14: #{hadamard_forward.1} parent=0 // pred_check
    _
  $region15: #{hadamard_forward.1} parent=0 // pred_check_branch
    %109 = sbr.rel (0) target = $region17
  $region16: #{hadamard_forward.1} parent=0 // pred_region
    _
  $region17: #{hadamard_forward.1} parent=0 // pred_fallthru
    _

// kernel: custom-call.2
$region0: #{custom-call.2}
  %s0 = inlined_call_operand.vmem [shape: f32[4,8,32], index: 0, kind: input, shape index: {}]
  %s1 = inlined_call_operand.vmem [shape: f32[4,8,32], index: 1, kind: input, shape index: {}]
  %s2 = inlined_call_operand.hbm [shape: c64[4,8,32], index: 2, kind: output, shape index: {}]
  %s3 = scalar_lea.hbm %s2, 512
  $region1: #{custom-call.2} parent=0
    #allocation0 [shape = 's32[1]{0}', space=sflag, size = 0x4, scoped, tag = 'scoped memory for custom-call.2']
    %4 = vsyncpa [#allocation0], 0
    %s5 = sshll.u32 %s0, 4
    %s6 = int_to_ptr.vmem [resolvable:$true] %s5
    %8 = dma.vmem_to_hbm [thread:$0]  %s6, 512, %s2, [#allocation0]
    %9 = dma.done [#allocation0], 512
    %10 = vsyncpa [#allocation0], 1
  $region2: #{custom-call.2} parent=0
    #allocation1 [shape = 's32[1]{0}', space=sflag, size = 0x4, scoped, tag = 'scoped memory for custom-call.2']
    %11 = vsyncpa [#allocation1], 0
    %s12 = sshll.u32 %s1, 4
    %s13 = int_to_ptr.vmem [resolvable:$true] %s12
    %15 = dma.vmem_to_hbm [thread:$0]  %s13, 512, %s3, [#allocation1]
    %16 = dma.done [#allocation1], 512
    %17 = vsyncpa [#allocation1], 1

</llo_original>
